<compile_context>
chip_gen: v7x
topology: tpu7x:2x2x1
jax: 0.10.0
libtpu: 0.0.40
codegen_flags: <defaults>
</compile_context>

<pallas_src>
import functools

import jax
import jax.numpy as jnp
from jax.experimental import pallas as pl
from jax.experimental.pallas import tpu as pltpu

NEG_SLOPE = 0.001   # matches nn.LeakyReLU(0.001) in the reference module
BN_EPS = 1e-5       # nn.BatchNorm1d default eps


def _linear_bn_act_kernel(x_ref, w_ref, b_ref, g_ref, beta_ref, o_ref, acc_ref,
                          *, inv_m, eps, neg_slope):
    """Fused Linear + BatchNorm1d(train) + LeakyReLU for one channel tile.

    grid = (cout_tiles, k_tiles); axis 1 is the K reduction (innermost).
    x_ref:    [M,  tk]  bf16
    w_ref:    [tk, tn]  bf16   (already transposed: [Cin, Cout] layout)
    b/g/beta: [1,  tn]  f32
    o_ref:    [M,  tn]  f32
    acc_ref:  [M,  tn]  f32 scratch (persists across the K axis)
    """
    k = pl.program_id(1)

    @pl.when(k == 0)
    def _():
        acc_ref[...] = jnp.zeros_like(acc_ref)

    acc_ref[...] += jnp.dot(x_ref[...], w_ref[...],
                            preferred_element_type=jnp.float32)

    @pl.when(k == pl.num_programs(1) - 1)
    def _():
        y = acc_ref[...] + b_ref[...]                        # [M, tn] f32
        # Per-channel batch statistics over the (full, un-padded) batch dim.
        mean = jnp.sum(y, axis=0, keepdims=True) * inv_m     # [1, tn]
        d = y - mean
        var = jnp.sum(d * d, axis=0, keepdims=True) * inv_m  # biased, like torch
        scale = g_ref[...] * jax.lax.rsqrt(var + eps)
        shift = beta_ref[...] - mean * scale
        z = y * scale + shift
        o_ref[...] = jnp.where(z >= 0, z, neg_slope * z).astype(o_ref.dtype)


def classification_layer_forward(x, w, b, gamma, beta,
                                 *, eps=BN_EPS, neg_slope=NEG_SLOPE):
    """x: [M, Cin] f32; w: [Cout, Cin] (nn.Linear layout); b/gamma/beta: [Cout]."""
    m, cin = x.shape
    cout = w.shape[0]

    # bf16 MXU operands, f32 accumulation (perf feedback).
    x_bf = x.astype(jnp.bfloat16)
    wt_bf = jnp.transpose(w).astype(jnp.bfloat16)            # [Cin, Cout]

    # K tiling: a single full-K block for typical classification-head sizes
    # (no activation padding / extra HBM copies); tile + zero-pad only if huge.
    tk = cin if cin <= 1024 else 512
    k_pad = pl.cdiv(cin, tk) * tk
    if k_pad != cin:
        x_bf = jnp.pad(x_bf, ((0, 0), (0, k_pad - cin)))
        wt_bf = jnp.pad(wt_bf, ((0, k_pad - cin), (0, 0)))
    nk = k_pad // tk

    # Lane-dense channel tiles; this axis is also the parallel axis (megacore).
    if cout % 256 == 0:
        tn = 256
    elif cout % 128 == 0:
        tn = 128
    else:
        tn = cout                                            # full-dim block
    nj = cout // tn

    b2 = b.reshape(1, cout).astype(jnp.float32)
    g2 = gamma.reshape(1, cout).astype(jnp.float32)
    beta2 = beta.reshape(1, cout).astype(jnp.float32)

    kernel = functools.partial(_linear_bn_act_kernel,
                               inv_m=1.0 / m, eps=eps, neg_slope=neg_slope)

    return pl.pallas_call(
        kernel,
        out_shape=jax.ShapeDtypeStruct((m, cout), jnp.float32),
        grid_spec=pltpu.PrefetchScalarGridSpec(
            num_scalar_prefetch=0,
            grid=(nj, nk),
            in_specs=[
                pl.BlockSpec((m, tk), lambda j, k: (0, k)),   # activations
                pl.BlockSpec((tk, tn), lambda j, k: (k, j)),  # weights
                pl.BlockSpec((1, tn), lambda j, k: (0, j)),   # bias
                pl.BlockSpec((1, tn), lambda j, k: (0, j)),   # gamma
                pl.BlockSpec((1, tn), lambda j, k: (0, j)),   # beta
            ],
            out_specs=pl.BlockSpec((m, tn), lambda j, k: (0, j)),
            scratch_shapes=[pltpu.VMEM((m, tn), jnp.float32)],
        ),
        compiler_params=pltpu.CompilerParams(
            dimension_semantics=("parallel", "arbitrary")),
    )(x_bf, wt_bf, b2, g2, beta2)


if __name__ == "__main__":
    key = jax.random.PRNGKey(0)
    kx, kw, kb = jax.random.split(key, 3)

    batch, in_channels, out_channels = 128, 384, 256

    x = jax.random.normal(kx, (batch, in_channels), jnp.float32)
    # nn.Linear default init: U(-1/sqrt(fan_in), 1/sqrt(fan_in))
    bound = float(in_channels) ** -0.5
    w = jax.random.uniform(kw, (out_channels, in_channels), jnp.float32,
                           -bound, bound)
    b = jax.random.uniform(kb, (out_channels,), jnp.float32, -bound, bound)
    # nn.BatchNorm1d default affine init
    gamma = jnp.ones((out_channels,), jnp.float32)
    beta = jnp.zeros((out_channels,), jnp.float32)

    out = classification_layer_forward(x, w, b, gamma, beta)
    out = jax.block_until_ready(out)

    # Pure-JAX f32 reference (training-mode BatchNorm1d: biased batch stats).
    y = x @ w.T + b
    mu = jnp.mean(y, axis=0, keepdims=True)
    var = jnp.mean((y - mu) ** 2, axis=0, keepdims=True)
    z = (y - mu) / jnp.sqrt(var + BN_EPS) * gamma + beta
    ref = jnp.where(z >= 0, z, NEG_SLOPE * z)

    assert out.shape == (batch, out_channels), out.shape
    assert bool(jnp.all(jnp.isfinite(out)))
    max_err = float(jnp.max(jnp.abs(out - ref)))
    assert max_err < 0.1, f"max abs error vs reference: {max_err}"
    print("KERNEL_OK")
</pallas_src>

<mosaic_0001>
module attributes {stable_mosaic.version = 11 : i64} {
  func.func @_linear_bn_act_kernel(%arg0: i32, %arg1: i32, %arg2: memref<128x384xbf16, #tpu.memory_space<vmem>>, %arg3: memref<384x256xbf16, #tpu.memory_space<vmem>>, %arg4: memref<1x256xf32, #tpu.memory_space<vmem>>, %arg5: memref<1x256xf32, #tpu.memory_space<vmem>>, %arg6: memref<1x256xf32, #tpu.memory_space<vmem>>, %arg7: memref<128x256xf32, #tpu.memory_space<vmem>>, %arg8: memref<128x256xf32, #tpu.memory_space<vmem>>) attributes {dimension_semantics = [#tpu.dimension_semantics<parallel>, #tpu.dimension_semantics<arbitrary>], iteration_bounds = array<i64: 1, 1>, scalar_prefetch = 0 : i64, scratch_operands = 1 : i64, tpu.core_type = #tpu.core_type<tc>, window_params = [{transform_indices = @transform_0, window_bounds = array<i64: 128, 384>}, {transform_indices = @transform_1, window_bounds = array<i64: 384, 256>}, {transform_indices = @transform_2, window_bounds = array<i64: 1, 256>}, {transform_indices = @transform_3, window_bounds = array<i64: 1, 256>}, {transform_indices = @transform_4, window_bounds = array<i64: 1, 256>}, {transform_indices = @transform_5, window_bounds = array<i64: 128, 256>}]} {
    %c0_i32 = arith.constant 0 : i32
    %0 = arith.cmpi eq, %arg1, %c0_i32 : i32
    %1 = arith.extui %0 : i1 to i32
    %c0_i32_0 = arith.constant 0 : i32
    %2 = arith.cmpi ne, %1, %c0_i32_0 : i32
    scf.if %2 {
      %cst_10 = arith.constant 0.000000e+00 : f32
      %12 = vector.broadcast %cst_10 : f32 to vector<128x256xf32>
      %c0_11 = arith.constant 0 : index
      %c0_12 = arith.constant 0 : index
      %13 = vector.load %arg8[%c0_11, %c0_12] : memref<128x256xf32, #tpu.memory_space<vmem>>, vector<128x256xf32>
      tpu.vector_store %arg8[%c0_11, %c0_12], %12 {strides = array<i32>} : memref<128x256xf32, #tpu.memory_space<vmem>>, vector<128x256xf32>,
    } else {
    }
    %c0 = arith.constant 0 : index
    %c0_1 = arith.constant 0 : index
    %3 = vector.load %arg8[%c0, %c0_1] : memref<128x256xf32, #tpu.memory_space<vmem>>, vector<128x256xf32>
    %c0_2 = arith.constant 0 : index
    %c0_3 = arith.constant 0 : index
    %4 = vector.load %arg2[%c0_2, %c0_3] : memref<128x384xbf16, #tpu.memory_space<vmem>>, vector<128x384xbf16>
    %c0_4 = arith.constant 0 : index
    %c0_5 = arith.constant 0 : index
    %5 = vector.load %arg3[%c0_4, %c0_5] : memref<384x256xbf16, #tpu.memory_space<vmem>>, vector<384x256xbf16>
    %cst = arith.constant dense<0.000000e+00> : vector<128x256xf32>
    %6 = tpu.matmul %4, %5, %cst {dimension_numbers = #tpu.dot_dimension_numbers<[1], [0], [0], [1], [0, 0, 1, 1], [], []>} : vector<128x384xbf16>, vector<384x256xbf16>, vector<128x256xf32> -> vector<128x256xf32>
    %7 = arith.addf %3, %6 : vector<128x256xf32>
    %c0_6 = arith.constant 0 : index
    %c0_7 = arith.constant 0 : index
    %8 = vector.load %arg8[%c0_6, %c0_7] : memref<128x256xf32, #tpu.memory_space<vmem>>, vector<128x256xf32>
    tpu.vector_store %arg8[%c0_6, %c0_7], %7 {strides = array<i32>} : memref<128x256xf32, #tpu.memory_space<vmem>>, vector<128x256xf32>,
    %c0_i32_8 = arith.constant 0 : i32
    %9 = arith.cmpi eq, %arg1, %c0_i32_8 : i32
    %10 = arith.extui %9 : i1 to i32
    %c0_i32_9 = arith.constant 0 : i32
    %11 = arith.cmpi ne, %10, %c0_i32_9 : i32
    scf.if %11 {
      %c0_10 = arith.constant 0 : index
      %c0_11 = arith.constant 0 : index
      %12 = vector.load %arg8[%c0_10, %c0_11] : memref<128x256xf32, #tpu.memory_space<vmem>>, vector<128x256xf32>
      %c0_12 = arith.constant 0 : index
      %c0_13 = arith.constant 0 : index
      %13 = vector.load %arg4[%c0_12, %c0_13] : memref<1x256xf32, #tpu.memory_space<vmem>>, vector<1x256xf32>
      %14 = vector.broadcast %13 : vector<1x256xf32> to vector<128x256xf32>
      %15 = arith.addf %12, %14 : vector<128x256xf32>
      %cst_14 = arith.constant dense<0.000000e+00> : vector<256xf32>
      %16 = vector.multi_reduction <add>, %15, %cst_14 [0] : vector<128x256xf32> to vector<256xf32>
      %17 = vector.shape_cast %16 : vector<256xf32> to vector<1x256xf32>
      %cst_15 = arith.constant 7.812500e-03 : f32
      %18 = vector.broadcast %cst_15 : f32 to vector<1x256xf32>
      %19 = arith.mulf %17, %18 : vector<1x256xf32>
      %20 = vector.broadcast %19 : vector<1x256xf32> to vector<128x256xf32>
      %21 = arith.subf %15, %20 : vector<128x256xf32>
      %22 = arith.mulf %21, %21 : vector<128x256xf32>
      %cst_16 = arith.constant dense<0.000000e+00> : vector<256xf32>
      %23 = vector.multi_reduction <add>, %22, %cst_16 [0] : vector<128x256xf32> to vector<256xf32>
      %24 = vector.shape_cast %23 : vector<256xf32> to vector<1x256xf32>
      %cst_17 = arith.constant 7.812500e-03 : f32
      %25 = vector.broadcast %cst_17 : f32 to vector<1x256xf32>
      %26 = arith.mulf %24, %25 : vector<1x256xf32>
      %c0_18 = arith.constant 0 : index
      %c0_19 = arith.constant 0 : index
      %27 = vector.load %arg5[%c0_18, %c0_19] : memref<1x256xf32, #tpu.memory_space<vmem>>, vector<1x256xf32>
      %cst_20 = arith.constant 9.99999974E-6 : f32
      %28 = vector.broadcast %cst_20 : f32 to vector<1x256xf32>
      %29 = arith.addf %26, %28 : vector<1x256xf32>
      %30 = math.rsqrt %29 : vector<1x256xf32>
      %31 = arith.mulf %27, %30 : vector<1x256xf32>
      %c0_21 = arith.constant 0 : index
      %c0_22 = arith.constant 0 : index
      %32 = vector.load %arg6[%c0_21, %c0_22] : memref<1x256xf32, #tpu.memory_space<vmem>>, vector<1x256xf32>
      %33 = arith.mulf %19, %31 : vector<1x256xf32>
      %34 = arith.subf %32, %33 : vector<1x256xf32>
      %35 = vector.broadcast %31 : vector<1x256xf32> to vector<128x256xf32>
      %36 = arith.mulf %15, %35 : vector<128x256xf32>
      %37 = vector.broadcast %34 : vector<1x256xf32> to vector<128x256xf32>
      %38 = arith.addf %36, %37 : vector<128x256xf32>
      %cst_23 = arith.constant 0.000000e+00 : f32
      %39 = vector.broadcast %cst_23 : f32 to vector<128x256xf32>
      %40 = arith.cmpf oge, %38, %39 : vector<128x256xf32>
      %cst_24 = arith.constant 1.000000e-03 : f32
      %41 = vector.broadcast %cst_24 : f32 to vector<128x256xf32>
      %42 = arith.mulf %41, %38 : vector<128x256xf32>
      %43 = arith.select %40, %38, %42 : vector<128x256xi1>, vector<128x256xf32>
      %c0_25 = arith.constant 0 : index
      %c0_26 = arith.constant 0 : index
      %44 = vector.load %arg7[%c0_25, %c0_26] : memref<128x256xf32, #tpu.memory_space<vmem>>, vector<128x256xf32>
      tpu.vector_store %arg7[%c0_25, %c0_26], %43 {strides = array<i32>} : memref<128x256xf32, #tpu.memory_space<vmem>>, vector<128x256xf32>,
    } else {
    }
    return
  }
  func.func @transform_0(%arg0: i32, %arg1: i32) -> (i32, i32) {
    %c0_i32 = arith.constant 0 : i32
    %c0_i32_0 = arith.constant 0 : i32
    return %c0_i32, %arg1 : i32, i32
  }
  func.func @transform_1(%arg0: i32, %arg1: i32) -> (i32, i32) {
    %c0_i32 = arith.constant 0 : i32
    return %arg1, %arg0 : i32, i32
  }
  func.func @transform_2(%arg0: i32, %arg1: i32) -> (i32, i32) {
    %c0_i32 = arith.constant 0 : i32
    %c0_i32_0 = arith.constant 0 : i32
    return %c0_i32, %arg0 : i32, i32
  }
  func.func @transform_3(%arg0: i32, %arg1: i32) -> (i32, i32) {
    %c0_i32 = arith.constant 0 : i32
    %c0_i32_0 = arith.constant 0 : i32
    return %c0_i32, %arg0 : i32, i32
  }
  func.func @transform_4(%arg0: i32, %arg1: i32) -> (i32, i32) {
    %c0_i32 = arith.constant 0 : i32
    %c0_i32_0 = arith.constant 0 : i32
    return %c0_i32, %arg0 : i32, i32
  }
  func.func @transform_5(%arg0: i32, %arg1: i32) -> (i32, i32) {
    %c0_i32 = arith.constant 0 : i32
    %c0_i32_0 = arith.constant 0 : i32
    return %c0_i32, %arg0 : i32, i32
  }
}

</mosaic_0001>

<llo_original>
// kernel: tpu_custom_call.1
$region0: #{tpu_custom_call.1}
  #allocation0 [shape = 'u32[]', space=smem, size = 0x4, offset = 0x4, fixed_abs, tag = 'smem constant byte address 0x4 - core index']
  #allocation1 [shape = 'u32[144,128]{1,0:T(1,128)}', space=vmem, size = 0x12000, scoped, tag = 'internal scratch']
  #allocation2 [shape = 'f32[128,256]{1,0:T(8,128)}', space=vmem, size = 0x20000, scoped, tag = 'scratch operand']
  %s0 = inlined_call_operand.hbm [shape: bf16[128,384], index: 0, kind: input, shape index: {}]
  %s1 = inlined_call_operand.hbm [shape: bf16[384,256], index: 1, kind: input, shape index: {}]
  %s2 = inlined_call_operand.vmem [shape: f32[1,256], index: 2, kind: input, shape index: {}]
  %s3 = inlined_call_operand.vmem [shape: f32[1,256], index: 3, kind: input, shape index: {}]
  %s4 = inlined_call_operand.vmem [shape: f32[1,256], index: 4, kind: input, shape index: {}]
  %s5 = inlined_call_operand.hbm [shape: f32[128,256], index: 5, kind: output, shape index: {}]
  %s6 = sld [smem:[#allocation0]]
  $region46: #{tpu_custom_call.1} parent=0
    _
  %s8 = ssub.s32 1, %s6
  %s9 = scalar_select 0, %s8, %s6
  $region1: #{tpu_custom_call.1} parent=0
    #allocation3 [shape = 'u8[98304]{0}', space=vmem, size = 0x18000, scoped, tag = 'input window, operand 0, single buffered']
    #allocation4 [shape = 's32[1]{0}', space=sflag, size = 0x4, scoped, tag = 'scoped memory for tpu_custom_call.1']
    #allocation5 [shape = 's32[1]{0}', space=sflag, size = 0x4, scoped, tag = 'scoped memory for tpu_custom_call.1']
    #allocation6 [shape = 'u8[196608]{0}', space=vmem, size = 0x30000, scoped, tag = 'input window, operand 1, single buffered']
    #allocation7 [shape = 's32[1]{0}', space=sflag, size = 0x4, scoped, tag = 'scoped memory for tpu_custom_call.1']
    #allocation8 [shape = 'u8[131072]{0}', space=vmem, size = 0x20000, scoped, tag = 'output window, operand 0, single buffered']
    %10 = vsyncpa [#allocation4], 0
    %11 = vsyncpa [#allocation7], 0
    %12 = vsyncpa [#allocation5], 0
    // Predicated region
    $region2: #{tpu_custom_call.1} parent=1 // pred_check
      _
    $region3: #{tpu_custom_call.1} parent=1 // pred_check_branch
      %14 = sbr.rel (0) target = $region5
    $region4: #{tpu_custom_call.1} parent=1 // pred_region
      %s16 = ssub.s32 3072, 3072
      %17 = vsyncadd [#allocation4], %s16
      %s18 = sshll.u32 [#allocation3], 4
      %s19 = int_to_ptr.vmem [resolvable:$true] %s18
      %24 = dma.hbm_to_vmem [thread:$0]  %s0, 3072, %s19, [#allocation4], 192, 192, 12
    $region5: #{tpu_custom_call.1} parent=1 // pred_fallthru
      _
    // Predicated region
    $region6: #{tpu_custom_call.1} parent=1 // pred_check
      _
    $region7: #{tpu_custom_call.1} parent=1 // pred_check_branch
      %26 = sbr.rel (0) target = $region9
    $region8: #{tpu_custom_call.1} parent=1 // pred_region
      %s28 = ssub.s32 6144, 6144
      %29 = vsyncadd [#allocation7], %s28
      %s30 = sshll.u32 [#allocation6], 4
      %s31 = int_to_ptr.vmem [resolvable:$true] %s30
      %36 = dma.hbm_to_vmem [thread:$0]  %s1, 6144, %s31, [#allocation7], 128, 128, 8
    $region9: #{tpu_custom_call.1} parent=1 // pred_fallthru
      _
    // Predicated region
    $region10: #{tpu_custom_call.1} parent=1 // pred_check
      _
    $region11: #{tpu_custom_call.1} parent=1 // pred_check_branch
      %38 = sbr.rel (0) target = $region13
    $region12: #{tpu_custom_call.1} parent=1 // pred_region
      _
    $region13: #{tpu_custom_call.1} parent=1 // pred_fallthru
      _
    // Predicated region
    $region14: #{tpu_custom_call.1} parent=1 // pred_check
      _
    $region15: #{tpu_custom_call.1} parent=1 // pred_check_branch
      %40 = sbr.rel (0) target = $region17
    $region16: #{tpu_custom_call.1} parent=1 // pred_region
      _
    $region17: #{tpu_custom_call.1} parent=1 // pred_fallthru
      _
    // Predicated region
    $region18: #{tpu_custom_call.1} parent=1 // pred_check
      _
    $region19: #{tpu_custom_call.1} parent=1 // pred_check_branch
      %42 = sbr.rel (0) target = $region21
    $region20: #{tpu_custom_call.1} parent=1 // pred_region
      _
    $region21: #{tpu_custom_call.1} parent=1 // pred_fallthru
      _
    // Predicated region
    $region22: #{tpu_custom_call.1} parent=1 // pred_check
      _
    $region23: #{tpu_custom_call.1} parent=1 // pred_check_branch
      %44 = sbr.rel (0) target = $region25
    $region24: #{tpu_custom_call.1} parent=1 // pred_region
      %45 = dma.done [#allocation4], 3072
    $region25: #{tpu_custom_call.1} parent=1 // pred_fallthru
      _
    // Predicated region
    $region26: #{tpu_custom_call.1} parent=1 // pred_check
      _
    $region27: #{tpu_custom_call.1} parent=1 // pred_check_branch
      %47 = sbr.rel (0) target = $region29
    $region28: #{tpu_custom_call.1} parent=1 // pred_region
      %48 = dma.done [#allocation7], 6144
    $region29: #{tpu_custom_call.1} parent=1 // pred_fallthru
      _
    %p50 = scmp.eq.s32.totalorder 0, 0
    // Predicated region
    $region30: #{tpu_custom_call.1} parent=1 // pred_check
      %p51 = pneg %p50
    $region31: #{tpu_custom_call.1} parent=1 // pred_check_branch
      %53 = sbr.rel (%p51) target = $region33
    $region32: #{tpu_custom_call.1} parent=1 // pred_region
      %54 = vst [vmem:[#allocation2] sm:$0xff] 0.0
      %55 = vst [vmem:[#allocation2 + $0x8] sm:$0xff] 0.0
      %56 = vst [vmem:[#allocation2 + $0x10] sm:$0xff] 0.0
      %57 = vst [vmem:[#allocation2 + $0x18] sm:$0xff] 0.0
      %58 = vst [vmem:[#allocation2 + $0x20] sm:$0xff] 0.0
      %59 = vst [vmem:[#allocation2 + $0x28] sm:$0xff] 0.0
      %60 = vst [vmem:[#allocation2 + $0x30] sm:$0xff] 0.0
      %61 = vst [vmem:[#allocation2 + $0x38] sm:$0xff] 0.0
      %62 = vst [vmem:[#allocation2 + $0x40] sm:$0xff] 0.0
      %63 = vst [vmem:[#allocation2 + $0x48] sm:$0xff] 0.0
      %64 = vst [vmem:[#allocation2 + $0x50] sm:$0xff] 0.0
      %65 = vst [vmem:[#allocation2 + $0x58] sm:$0xff] 0.0
      %66 = vst [vmem:[#allocation2 + $0x60] sm:$0xff] 0.0
      %67 = vst [vmem:[#allocation2 + $0x68] sm:$0xff] 0.0
      %68 = vst [vmem:[#allocation2 + $0x70] sm:$0xff] 0.0
      %69 = vst [vmem:[#allocation2 + $0x78] sm:$0xff] 0.0
      %70 = vst [vmem:[#allocation2 + $0x80] sm:$0xff] 0.0
      %71 = vst [vmem:[#allocation2 + $0x88] sm:$0xff] 0.0
      %72 = vst [vmem:[#allocation2 + $0x90] sm:$0xff] 0.0
      %73 = vst [vmem:[#allocation2 + $0x98] sm:$0xff] 0.0
      %74 = vst [vmem:[#allocation2 + $0xa0] sm:$0xff] 0.0
      %75 = vst [vmem:[#allocation2 + $0xa8] sm:$0xff] 0.0
      %76 = vst [vmem:[#allocation2 + $0xb0] sm:$0xff] 0.0
      %77 = vst [vmem:[#allocation2 + $0xb8] sm:$0xff] 0.0
      %78 = vst [vmem:[#allocation2 + $0xc0] sm:$0xff] 0.0
      %79 = vst [vmem:[#allocation2 + $0xc8] sm:$0xff] 0.0
      %80 = vst [vmem:[#allocation2 + $0xd0] sm:$0xff] 0.0
      %81 = vst [vmem:[#allocation2 + $0xd8] sm:$0xff] 0.0
      %82 = vst [vmem:[#allocation2 + $0xe0] sm:$0xff] 0.0
      %83 = vst [vmem:[#allocation2 + $0xe8] sm:$0xff] 0.0
      %84 = vst [vmem:[#allocation2 + $0xf0] sm:$0xff] 0.0
      %85 = vst [vmem:[#allocation2 + $0xf8] sm:$0xff] 0.0
    $region33: #{tpu_custom_call.1} parent=1 // pred_fallthru
      _
    %v86 = vld [vmem:[#allocation2] sm:$0xff]
    %v87 = vld [vmem:[#allocation2 + $0x8] sm:$0xff]
    %v88 = vld [vmem:[#allocation2 + $0x10] sm:$0xff]
    %v89 = vld [vmem:[#allocation2 + $0x18] sm:$0xff]
    %v90 = vld [vmem:[#allocation2 + $0x20] sm:$0xff]
    %v91 = vld [vmem:[#allocation2 + $0x28] sm:$0xff]
    %v92 = vld [vmem:[#allocation2 + $0x30] sm:$0xff]
    %v93 = vld [vmem:[#allocation2 + $0x38] sm:$0xff]
    %v94 = vld [vmem:[#allocation2 + $0x40] sm:$0xff]
    %v95 = vld [vmem:[#allocation2 + $0x48] sm:$0xff]
    %v96 = vld [vmem:[#allocation2 + $0x50] sm:$0xff]
    %v97 = vld [vmem:[#allocation2 + $0x58] sm:$0xff]
    %v98 = vld [vmem:[#allocation2 + $0x60] sm:$0xff]
    %v99 = vld [vmem:[#allocation2 + $0x68] sm:$0xff]
    %v100 = vld [vmem:[#allocation2 + $0x70] sm:$0xff]
    %v101 = vld [vmem:[#allocation2 + $0x78] sm:$0xff]
    %v102 = vld [vmem:[#allocation2 + $0x80] sm:$0xff]
    %v103 = vld [vmem:[#allocation2 + $0x88] sm:$0xff]
    %v104 = vld [vmem:[#allocation2 + $0x90] sm:$0xff]
    %v105 = vld [vmem:[#allocation2 + $0x98] sm:$0xff]
    %v106 = vld [vmem:[#allocation2 + $0xa0] sm:$0xff]
    %v107 = vld [vmem:[#allocation2 + $0xa8] sm:$0xff]
    %v108 = vld [vmem:[#allocation2 + $0xb0] sm:$0xff]
    %v109 = vld [vmem:[#allocation2 + $0xb8] sm:$0xff]
    %v110 = vld [vmem:[#allocation2 + $0xc0] sm:$0xff]
    %v111 = vld [vmem:[#allocation2 + $0xc8] sm:$0xff]
    %v112 = vld [vmem:[#allocation2 + $0xd0] sm:$0xff]
    %v113 = vld [vmem:[#allocation2 + $0xd8] sm:$0xff]
    %v114 = vld [vmem:[#allocation2 + $0xe0] sm:$0xff]
    %v115 = vld [vmem:[#allocation2 + $0xe8] sm:$0xff]
    %v116 = vld [vmem:[#allocation2 + $0xf0] sm:$0xff]
    %v117 = vld [vmem:[#allocation2 + $0xf8] sm:$0xff]
    %v118 = vld [vmem:[#allocation3] sm:$0xff]
    %v119 = vld [vmem:[#allocation3 + $0x8] sm:$0xf]
    %v120 = vld [vmem:[#allocation3 + $0xc] sm:$0xff]
    %v121 = vld [vmem:[#allocation3 + $0x14] sm:$0xf]
    %v122 = vld [vmem:[#allocation3 + $0x18] sm:$0xff]
    %v123 = vld [vmem:[#allocation3 + $0x20] sm:$0xf]
    %v124 = vld [vmem:[#allocation3 + $0x24] sm:$0xff]
    %v125 = vld [vmem:[#allocation3 + $0x2c] sm:$0xf]
    %v126 = vld [vmem:[#allocation3 + $0x30] sm:$0xff]
    %v127 = vld [vmem:[#allocation3 + $0x38] sm:$0xf]
    %v128 = vld [vmem:[#allocation3 + $0x3c] sm:$0xff]
    %v129 = vld [vmem:[#allocation3 + $0x44] sm:$0xf]
    %v130 = vld [vmem:[#allocation3 + $0x48] sm:$0xff]
    %v131 = vld [vmem:[#allocation3 + $0x50] sm:$0xf]
    %v132 = vld [vmem:[#allocation3 + $0x54] sm:$0xff]
    %v133 = vld [vmem:[#allocation3 + $0x5c] sm:$0xf]
    %v134 = vld [vmem:[#allocation3 + $0x60] sm:$0xff]
    %v135 = vld [vmem:[#allocation3 + $0x68] sm:$0xf]
    %v136 = vld [vmem:[#allocation3 + $0x6c] sm:$0xff]
    %v137 = vld [vmem:[#allocation3 + $0x74] sm:$0xf]
    %v138 = vld [vmem:[#allocation3 + $0x78] sm:$0xff]
    %v139 = vld [vmem:[#allocation3 + $0x80] sm:$0xf]
    %v140 = vld [vmem:[#allocation3 + $0x84] sm:$0xff]
    %v141 = vld [vmem:[#allocation3 + $0x8c] sm:$0xf]
    %v142 = vld [vmem:[#allocation3 + $0x90] sm:$0xff]
    %v143 = vld [vmem:[#allocation3 + $0x98] sm:$0xf]
    %v144 = vld [vmem:[#allocation3 + $0x9c] sm:$0xff]
    %v145 = vld [vmem:[#allocation3 + $0xa4] sm:$0xf]
    %v146 = vld [vmem:[#allocation3 + $0xa8] sm:$0xff]
    %v147 = vld [vmem:[#allocation3 + $0xb0] sm:$0xf]
    %v148 = vld [vmem:[#allocation3 + $0xb4] sm:$0xff]
    %v149 = vld [vmem:[#allocation3 + $0xbc] sm:$0xf]
    %v150 = vld [vmem:[#allocation6] sm:$0xff]
    %v151 = vld [vmem:[#allocation6 + $0x8] sm:$0xff]
    %v152 = vld [vmem:[#allocation6 + $0x10] sm:$0xff]
    %v153 = vld [vmem:[#allocation6 + $0x18] sm:$0xff]
    %v154 = vld [vmem:[#allocation6 + $0x20] sm:$0xff]
    %v155 = vld [vmem:[#allocation6 + $0x28] sm:$0xff]
    %v156 = vld [vmem:[#allocation6 + $0x30] sm:$0xff]
    %v157 = vld [vmem:[#allocation6 + $0x38] sm:$0xff]
    %v158 = vld [vmem:[#allocation6 + $0x40] sm:$0xff]
    %v159 = vld [vmem:[#allocation6 + $0x48] sm:$0xff]
    %v160 = vld [vmem:[#allocation6 + $0x50] sm:$0xff]
    %v161 = vld [vmem:[#allocation6 + $0x58] sm:$0xff]
    %v162 = vld [vmem:[#allocation6 + $0x60] sm:$0xff]
    %v163 = vld [vmem:[#allocation6 + $0x68] sm:$0xff]
    %v164 = vld [vmem:[#allocation6 + $0x70] sm:$0xff]
    %v165 = vld [vmem:[#allocation6 + $0x78] sm:$0xff]
    %v166 = vld [vmem:[#allocation6 + $0x80] sm:$0xff]
    %v167 = vld [vmem:[#allocation6 + $0x88] sm:$0xff]
    %v168 = vld [vmem:[#allocation6 + $0x90] sm:$0xff]
    %v169 = vld [vmem:[#allocation6 + $0x98] sm:$0xff]
    %v170 = vld [vmem:[#allocation6 + $0xa0] sm:$0xff]
    %v171 = vld [vmem:[#allocation6 + $0xa8] sm:$0xff]
    %v172 = vld [vmem:[#allocation6 + $0xb0] sm:$0xff]
    %v173 = vld [vmem:[#allocation6 + $0xb8] sm:$0xff]
    %v174 = vld [vmem:[#allocation6 + $0xc0] sm:$0xff]
    %v175 = vld [vmem:[#allocation6 + $0xc8] sm:$0xff]
    %v176 = vld [vmem:[#allocation6 + $0xd0] sm:$0xff]
    %v177 = vld [vmem:[#allocation6 + $0xd8] sm:$0xff]
    %v178 = vld [vmem:[#allocation6 + $0xe0] sm:$0xff]
    %v179 = vld [vmem:[#allocation6 + $0xe8] sm:$0xff]
    %v180 = vld [vmem:[#allocation6 + $0xf0] sm:$0xff]
    %v181 = vld [vmem:[#allocation6 + $0xf8] sm:$0xff]
    %v182 = vld [vmem:[#allocation6 + $0x100] sm:$0xff]
    %v183 = vld [vmem:[#allocation6 + $0x108] sm:$0xff]
    %v184 = vld [vmem:[#allocation6 + $0x110] sm:$0xff]
    %v185 = vld [vmem:[#allocation6 + $0x118] sm:$0xff]
    %v186 = vld [vmem:[#allocation6 + $0x120] sm:$0xff]
    %v187 = vld [vmem:[#allocation6 + $0x128] sm:$0xff]
    %v188 = vld [vmem:[#allocation6 + $0x130] sm:$0xff]
    %v189 = vld [vmem:[#allocation6 + $0x138] sm:$0xff]
    %v190 = vld [vmem:[#allocation6 + $0x140] sm:$0xff]
    %v191 = vld [vmem:[#allocation6 + $0x148] sm:$0xff]
    %v192 = vld [vmem:[#allocation6 + $0x150] sm:$0xff]
    %v193 = vld [vmem:[#allocation6 + $0x158] sm:$0xff]
    %v194 = vld [vmem:[#allocation6 + $0x160] sm:$0xff]
    %v195 = vld [vmem:[#allocation6 + $0x168] sm:$0xff]
    %v196 = vld [vmem:[#allocation6 + $0x170] sm:$0xff]
    %v197 = vld [vmem:[#allocation6 + $0x178] sm:$0xff]
    %v230 = vunpack.c.l.b16 %v118
    %v231 = vunpack.c.h.b16 %v118
    %v232 = vunpack.c.l.b16 %v119
    %v233 = vunpack.c.l.b16 %v120
    %v234 = vunpack.c.h.b16 %v120
    %v235 = vunpack.c.l.b16 %v121
    %v236 = vunpack.c.l.b16 %v122
    %v237 = vunpack.c.h.b16 %v122
    %v238 = vunpack.c.l.b16 %v123
    %v239 = vunpack.c.l.b16 %v124
    %v240 = vunpack.c.h.b16 %v124
    %v241 = vunpack.c.l.b16 %v125
    %v242 = vunpack.c.l.b16 %v126
    %v243 = vunpack.c.h.b16 %v126
    %v244 = vunpack.c.l.b16 %v127
    %v245 = vunpack.c.l.b16 %v128
    %v246 = vunpack.c.h.b16 %v128
    %v247 = vunpack.c.l.b16 %v129
    %v248 = vunpack.c.l.b16 %v130
    %v249 = vunpack.c.h.b16 %v130
    %v250 = vunpack.c.l.b16 %v131
    %v251 = vunpack.c.l.b16 %v132
    %v252 = vunpack.c.h.b16 %v132
    %v253 = vunpack.c.l.b16 %v133
    %v254 = vunpack.c.l.b16 %v134
    %v255 = vunpack.c.h.b16 %v134
    %v256 = vunpack.c.l.b16 %v135
    %v257 = vunpack.c.l.b16 %v136
    %v258 = vunpack.c.h.b16 %v136
    %v259 = vunpack.c.l.b16 %v137
    %v260 = vunpack.c.l.b16 %v138
    %v261 = vunpack.c.h.b16 %v138
    %v262 = vunpack.c.l.b16 %v139
    %v263 = vunpack.c.l.b16 %v140
    %v264 = vunpack.c.h.b16 %v140
    %v265 = vunpack.c.l.b16 %v141
    %v266 = vunpack.c.l.b16 %v142
    %v267 = vunpack.c.h.b16 %v142
    %v268 = vunpack.c.l.b16 %v143
    %v269 = vunpack.c.l.b16 %v144
    %v270 = vunpack.c.h.b16 %v144
    %v271 = vunpack.c.l.b16 %v145
    %v272 = vunpack.c.l.b16 %v146
    %v273 = vunpack.c.h.b16 %v146
    %v274 = vunpack.c.l.b16 %v147
    %v275 = vunpack.c.l.b16 %v148
    %v276 = vunpack.c.h.b16 %v148
    %v277 = vunpack.c.l.b16 %v149
    %v278 = vpack.c.b16 %v233, %v230
    %v279 = vpack.c.b16 %v234, %v231
    %v280 = vpack.c.b16 %v235, %v232
    %v281 = vpack.c.b16 %v239, %v236
    %v282 = vpack.c.b16 %v240, %v237
    %v283 = vpack.c.b16 %v241, %v238
    %v284 = vpack.c.b16 %v245, %v242
    %v285 = vpack.c.b16 %v246, %v243
    %v286 = vpack.c.b16 %v247, %v244
    %v287 = vpack.c.b16 %v251, %v248
    %v288 = vpack.c.b16 %v252, %v249
    %v289 = vpack.c.b16 %v253, %v250
    %v290 = vpack.c.b16 %v257, %v254
    %v291 = vpack.c.b16 %v258, %v255
    %v292 = vpack.c.b16 %v259, %v256
    %v293 = vpack.c.b16 %v263, %v260
    %v294 = vpack.c.b16 %v264, %v261
    %v295 = vpack.c.b16 %v265, %v262
    %v296 = vpack.c.b16 %v269, %v266
    %v297 = vpack.c.b16 %v270, %v267
    %v298 = vpack.c.b16 %v271, %v268
    %v299 = vpack.c.b16 %v275, %v272
    %v300 = vpack.c.b16 %v276, %v273
    %v301 = vpack.c.b16 %v277, %v274
    %v374 = vunpack.c.l.b16 %v150
    %v375 = vunpack.c.h.b16 %v150
    %v376 = vunpack.c.l.b16 %v151
    %v377 = vunpack.c.h.b16 %v151
    %v378 = vunpack.c.l.b16 %v152
    %v379 = vunpack.c.h.b16 %v152
    %v380 = vunpack.c.l.b16 %v153
    %v381 = vunpack.c.h.b16 %v153
    %v382 = vunpack.c.l.b16 %v154
    %v383 = vunpack.c.h.b16 %v154
    %v384 = vunpack.c.l.b16 %v155
    %v385 = vunpack.c.h.b16 %v155
    %v386 = vunpack.c.l.b16 %v156
    %v387 = vunpack.c.h.b16 %v156
    %v388 = vunpack.c.l.b16 %v157
    %v389 = vunpack.c.h.b16 %v157
    %v390 = vunpack.c.l.b16 %v158
    %v391 = vunpack.c.h.b16 %v158
    %v392 = vunpack.c.l.b16 %v159
    %v393 = vunpack.c.h.b16 %v159
    %v394 = vunpack.c.l.b16 %v160
    %v395 = vunpack.c.h.b16 %v160
    %v396 = vunpack.c.l.b16 %v161
    %v397 = vunpack.c.h.b16 %v161
    %v398 = vunpack.c.l.b16 %v162
    %v399 = vunpack.c.h.b16 %v162
    %v400 = vunpack.c.l.b16 %v163
    %v401 = vunpack.c.h.b16 %v163
    %v402 = vunpack.c.l.b16 %v164
    %v403 = vunpack.c.h.b16 %v164
    %v404 = vunpack.c.l.b16 %v165
    %v405 = vunpack.c.h.b16 %v165
    %v406 = vunpack.c.l.b16 %v166
    %v407 = vunpack.c.h.b16 %v166
    %v408 = vunpack.c.l.b16 %v167
    %v409 = vunpack.c.h.b16 %v167
    %v410 = vunpack.c.l.b16 %v168
    %v411 = vunpack.c.h.b16 %v168
    %v412 = vunpack.c.l.b16 %v169
    %v413 = vunpack.c.h.b16 %v169
    %v414 = vunpack.c.l.b16 %v170
    %v415 = vunpack.c.h.b16 %v170
    %v416 = vunpack.c.l.b16 %v171
    %v417 = vunpack.c.h.b16 %v171
    %v418 = vunpack.c.l.b16 %v172
    %v419 = vunpack.c.h.b16 %v172
    %v420 = vunpack.c.l.b16 %v173
    %v421 = vunpack.c.h.b16 %v173
    %v422 = vunpack.c.l.b16 %v174
    %v423 = vunpack.c.h.b16 %v174
    %v424 = vunpack.c.l.b16 %v175
    %v425 = vunpack.c.h.b16 %v175
    %v426 = vunpack.c.l.b16 %v176
    %v427 = vunpack.c.h.b16 %v176
    %v428 = vunpack.c.l.b16 %v177
    %v429 = vunpack.c.h.b16 %v177
    %v430 = vunpack.c.l.b16 %v178
    %v431 = vunpack.c.h.b16 %v178
    %v432 = vunpack.c.l.b16 %v179
    %v433 = vunpack.c.h.b16 %v179
    %v434 = vunpack.c.l.b16 %v180
    %v435 = vunpack.c.h.b16 %v180
    %v436 = vunpack.c.l.b16 %v181
    %v437 = vunpack.c.h.b16 %v181
    %v438 = vunpack.c.l.b16 %v182
    %v439 = vunpack.c.h.b16 %v182
    %v440 = vunpack.c.l.b16 %v183
    %v441 = vunpack.c.h.b16 %v183
    %v442 = vunpack.c.l.b16 %v184
    %v443 = vunpack.c.h.b16 %v184
    %v444 = vunpack.c.l.b16 %v185
    %v445 = vunpack.c.h.b16 %v185
    %v446 = vunpack.c.l.b16 %v186
    %v447 = vunpack.c.h.b16 %v186
    %v448 = vunpack.c.l.b16 %v187
    %v449 = vunpack.c.h.b16 %v187
    %v450 = vunpack.c.l.b16 %v188
    %v451 = vunpack.c.h.b16 %v188
    %v452 = vunpack.c.l.b16 %v189
    %v453 = vunpack.c.h.b16 %v189
    %v454 = vunpack.c.l.b16 %v190
    %v455 = vunpack.c.h.b16 %v190
    %v456 = vunpack.c.l.b16 %v191
    %v457 = vunpack.c.h.b16 %v191
    %v458 = vunpack.c.l.b16 %v192
    %v459 = vunpack.c.h.b16 %v192
    %v460 = vunpack.c.l.b16 %v193
    %v461 = vunpack.c.h.b16 %v193
    %v462 = vunpack.c.l.b16 %v194
    %v463 = vunpack.c.h.b16 %v194
    %v464 = vunpack.c.l.b16 %v195
    %v465 = vunpack.c.h.b16 %v195
    %v466 = vunpack.c.l.b16 %v196
    %v467 = vunpack.c.h.b16 %v196
    %v468 = vunpack.c.l.b16 %v197
    %v469 = vunpack.c.h.b16 %v197
    %v470 = vpack.c.b16 %v376, %v374
    %v471 = vpack.c.b16 %v377, %v375
    %v472 = vpack.c.b16 %v380, %v378
    %v473 = vpack.c.b16 %v381, %v379
    %v474 = vpack.c.b16 %v384, %v382
    %v475 = vpack.c.b16 %v385, %v383
    %v476 = vpack.c.b16 %v388, %v386
    %v477 = vpack.c.b16 %v389, %v387
    %v478 = vpack.c.b16 %v392, %v390
    %v479 = vpack.c.b16 %v393, %v391
    %v480 = vpack.c.b16 %v396, %v394
    %v481 = vpack.c.b16 %v397, %v395
    %v482 = vpack.c.b16 %v400, %v398
    %v483 = vpack.c.b16 %v401, %v399
    %v484 = vpack.c.b16 %v404, %v402
    %v485 = vpack.c.b16 %v405, %v403
    %v486 = vpack.c.b16 %v408, %v406
    %v487 = vpack.c.b16 %v409, %v407
    %v488 = vpack.c.b16 %v412, %v410
    %v489 = vpack.c.b16 %v413, %v411
    %v490 = vpack.c.b16 %v416, %v414
    %v491 = vpack.c.b16 %v417, %v415
    %v492 = vpack.c.b16 %v420, %v418
    %v493 = vpack.c.b16 %v421, %v419
    %v494 = vpack.c.b16 %v424, %v422
    %v495 = vpack.c.b16 %v425, %v423
    %v496 = vpack.c.b16 %v428, %v426
    %v497 = vpack.c.b16 %v429, %v427
    %v498 = vpack.c.b16 %v432, %v430
    %v499 = vpack.c.b16 %v433, %v431
    %v500 = vpack.c.b16 %v436, %v434
    %v501 = vpack.c.b16 %v437, %v435
    %v502 = vpack.c.b16 %v440, %v438
    %v503 = vpack.c.b16 %v441, %v439
    %v504 = vpack.c.b16 %v444, %v442
    %v505 = vpack.c.b16 %v445, %v443
    %v506 = vpack.c.b16 %v448, %v446
    %v507 = vpack.c.b16 %v449, %v447
    %v508 = vpack.c.b16 %v452, %v450
    %v509 = vpack.c.b16 %v453, %v451
    %v510 = vpack.c.b16 %v456, %v454
    %v511 = vpack.c.b16 %v457, %v455
    %v512 = vpack.c.b16 %v460, %v458
    %v513 = vpack.c.b16 %v461, %v459
    %v514 = vpack.c.b16 %v464, %v462
    %v515 = vpack.c.b16 %v465, %v463
    %v516 = vpack.c.b16 %v468, %v466
    %v517 = vpack.c.b16 %v469, %v467
    %566 = vmatprep.subr.bf16.mxu0 %v471
    %567 = vmatpush1.bf16.msra.mxu0 %v470
    %568 = vmatprep.subr.bf16.mxu0 %v473
    %569 = vmatpush1.bf16.msra.mxu0 %v472
    %570 = vmatprep.subr.bf16.mxu0 %v475
    %571 = vmatpush1.bf16.msra.mxu0 %v474
    %572 = vmatprep.subr.bf16.mxu0 %v477
    %573 = vmatpush1.bf16.msra.mxu0 %v476
    %574 = vmatprep.subr.bf16.mxu0 %v479
    %575 = vmatpush1.bf16.msra.mxu0 %v478
    %576 = vmatprep.subr.bf16.mxu0 %v481
    %577 = vmatpush1.bf16.msra.mxu0 %v480
    %578 = vmatprep.subr.bf16.mxu0 %v483
    %579 = vmatpush1.bf16.msra.mxu0 %v482
    %580 = vmatprep.subr.bf16.mxu0 %v485
    %581 = vmatpush1.bf16.msra.mxu0 %v484
    %582 = vmatprep.subr.bf16.mxu0 %v487
    %583 = vmatpush1.bf16.msra.mxu0 %v486
    %584 = vmatprep.subr.bf16.mxu0 %v489
    %585 = vmatpush1.bf16.msra.mxu0 %v488
    %586 = vmatprep.subr.bf16.mxu0 %v491
    %587 = vmatpush1.bf16.msra.mxu0 %v490
    %588 = vmatprep.subr.bf16.mxu0 %v493
    %589 = vmatpush1.bf16.msra.mxu0 %v492
    %590 = vmatprep.subr.bf16.mxu0 %v495
    %591 = vmatpush1.bf16.msra.mxu0 %v494
    %592 = vmatprep.subr.bf16.mxu0 %v497
    %593 = vmatpush1.bf16.msra.mxu0 %v496
    %594 = vmatprep.subr.bf16.mxu0 %v499
    %595 = vmatpush1.bf16.msra.mxu0 %v498
    %596 = vmatprep.subr.bf16.mxu0 %v501
    %597 = vmatpush1.bf16.msra.mxu0 %v500
    %598 = vmatprep.mubr.bf16.mxu0 %v279
    %599 = vmatmul.mubr.bf16.gmra.mrb[0].mxu0 %v278
    %v600 = vpop.f32.mrb[0].mxu0
    %v601 = vadd.f32 0.0, %v600
    %v602 = vpop.f32.mrb[0].mxu0
    %v603 = vadd.f32 0.0, %v602
    %v604 = vpop.f32.mrb[0].mxu0
    %v605 = vadd.f32 0.0, %v604
    %v606 = vpop.f32.mrb[0].mxu0
    %v607 = vadd.f32 0.0, %v606
    %608 = vmatprep.mubr.bf16.mxu0 %v282
    %609 = vmatmul.mubr.bf16.gmra.mrb[0].mxu0 %v281
    %v610 = vpop.f32.mrb[0].mxu0
    %v611 = vadd.f32 0.0, %v610
    %v612 = vpop.f32.mrb[0].mxu0
    %v613 = vadd.f32 0.0, %v612
    %v614 = vpop.f32.mrb[0].mxu0
    %v615 = vadd.f32 0.0, %v614
    %v616 = vpop.f32.mrb[0].mxu0
    %v617 = vadd.f32 0.0, %v616
    %618 = vmatprep.mubr.bf16.mxu0 %v285
    %619 = vmatmul.mubr.bf16.gmra.mrb[0].mxu0 %v284
    %v620 = vpop.f32.mrb[0].mxu0
    %v621 = vadd.f32 0.0, %v620
    %v622 = vpop.f32.mrb[0].mxu0
    %v623 = vadd.f32 0.0, %v622
    %v624 = vpop.f32.mrb[0].mxu0
    %v625 = vadd.f32 0.0, %v624
    %v626 = vpop.f32.mrb[0].mxu0
    %v627 = vadd.f32 0.0, %v626
    %628 = vmatprep.mubr.bf16.mxu0 %v288
    %629 = vmatmul.mubr.bf16.gmra.mrb[0].mxu0 %v287
    %v630 = vpop.f32.mrb[0].mxu0
    %v631 = vadd.f32 0.0, %v630
    %v632 = vpop.f32.mrb[0].mxu0
    %v633 = vadd.f32 0.0, %v632
    %v634 = vpop.f32.mrb[0].mxu0
    %v635 = vadd.f32 0.0, %v634
    %v636 = vpop.f32.mrb[0].mxu0
    %v637 = vadd.f32 0.0, %v636
    %638 = vmatprep.mubr.bf16.mxu0 %v291
    %639 = vmatmul.mubr.bf16.gmra.mrb[0].mxu0 %v290
    %v640 = vpop.f32.mrb[0].mxu0
    %v641 = vadd.f32 0.0, %v640
    %v642 = vpop.f32.mrb[0].mxu0
    %v643 = vadd.f32 0.0, %v642
    %v644 = vpop.f32.mrb[0].mxu0
    %v645 = vadd.f32 0.0, %v644
    %v646 = vpop.f32.mrb[0].mxu0
    %v647 = vadd.f32 0.0, %v646
    %648 = vmatprep.mubr.bf16.mxu0 %v294
    %649 = vmatmul.mubr.bf16.gmra.mrb[0].mxu0 %v293
    %v650 = vpop.f32.mrb[0].mxu0
    %v651 = vadd.f32 0.0, %v650
    %v652 = vpop.f32.mrb[0].mxu0
    %v653 = vadd.f32 0.0, %v652
    %v654 = vpop.f32.mrb[0].mxu0
    %v655 = vadd.f32 0.0, %v654
    %v656 = vpop.f32.mrb[0].mxu0
    %v657 = vadd.f32 0.0, %v656
    %658 = vmatprep.mubr.bf16.mxu0 %v297
    %659 = vmatmul.mubr.bf16.gmra.mrb[0].mxu0 %v296
    %v660 = vpop.f32.mrb[0].mxu0
    %v661 = vadd.f32 0.0, %v660
    %v662 = vpop.f32.mrb[0].mxu0
    %v663 = vadd.f32 0.0, %v662
    %v664 = vpop.f32.mrb[0].mxu0
    %v665 = vadd.f32 0.0, %v664
    %v666 = vpop.f32.mrb[0].mxu0
    %v667 = vadd.f32 0.0, %v666
    %668 = vmatprep.mubr.bf16.mxu0 %v300
    %669 = vmatmul.mubr.bf16.gmra.mrb[0].mxu0 %v299
    %v670 = vpop.f32.mrb[0].mxu0
    %v671 = vadd.f32 0.0, %v670
    %v672 = vpop.f32.mrb[0].mxu0
    %v673 = vadd.f32 0.0, %v672
    %v674 = vpop.f32.mrb[0].mxu0
    %v675 = vadd.f32 0.0, %v674
    %v676 = vpop.f32.mrb[0].mxu0
    %v677 = vadd.f32 0.0, %v676
    %678 = vdwg.mxu0
    %679 = vmatprep.subr.bf16.mxu0 %v503
    %680 = vmatpush1.bf16.msra.mxu0 %v502
    %681 = vmatprep.subr.bf16.mxu0 %v505
    %682 = vmatpush1.bf16.msra.mxu0 %v504
    %683 = vmatprep.subr.bf16.mxu0 %v507
    %684 = vmatpush1.bf16.msra.mxu0 %v506
    %685 = vmatprep.subr.bf16.mxu0 %v509
    %686 = vmatpush1.bf16.msra.mxu0 %v508
    %687 = vmatprep.subr.bf16.mxu0 %v511
    %688 = vmatpush1.bf16.msra.mxu0 %v510
    %689 = vmatprep.subr.bf16.mxu0 %v513
    %690 = vmatpush1.bf16.msra.mxu0 %v512
    %691 = vmatprep.subr.bf16.mxu0 %v515
    %692 = vmatpush1.bf16.msra.mxu0 %v514
    %693 = vmatprep.subr.bf16.mxu0 %v517
    %694 = vmatpush1.bf16.msra.mxu0 %v516
    %695 = vmatprep.subr.bf16.mxu0 0
    %696 = vmatpush1.bf16.msra.mxu0 0
    %697 = vmatprep.subr.bf16.mxu0 0
    %698 = vmatpush1.bf16.msra.mxu0 0
    %699 = vmatprep.subr.bf16.mxu0 0
    %700 = vmatpush1.bf16.msra.mxu0 0
    %701 = vmatprep.subr.bf16.mxu0 0
    %702 = vmatpush1.bf16.msra.mxu0 0
    %703 = vmatprep.subr.bf16.mxu0 0
    %704 = vmatpush1.bf16.msra.mxu0 0
    %705 = vmatprep.subr.bf16.mxu0 0
    %706 = vmatpush1.bf16.msra.mxu0 0
    %707 = vmatprep.subr.bf16.mxu0 0
    %708 = vmatpush1.bf16.msra.mxu0 0
    %709 = vmatprep.subr.bf16.mxu0 0
    %710 = vmatpush1.bf16.msra.mxu0 0
    %711 = vmatprep.mubr.bf16.mxu0 0
    %712 = vmatmul.mubr.bf16.gmra.mrb[0].mxu0 %v280
    %v713 = vpop.f32.mrb[0].mxu0
    %v714 = vadd.f32 %v601, %v713
    %v715 = vpop.f32.mrb[0].mxu0
    %v716 = vadd.f32 %v603, %v715
    %v717 = vpop.f32.mrb[0].mxu0
    %v718 = vadd.f32 %v605, %v717
    %v719 = vpop.f32.mrb[0].mxu0
    %v720 = vadd.f32 %v607, %v719
    %721 = vmatprep.mubr.bf16.mxu0 0
    %722 = vmatmul.mubr.bf16.gmra.mrb[0].mxu0 %v283
    %v723 = vpop.f32.mrb[0].mxu0
    %v724 = vadd.f32 %v611, %v723
    %v725 = vpop.f32.mrb[0].mxu0
    %v726 = vadd.f32 %v613, %v725
    %v727 = vpop.f32.mrb[0].mxu0
    %v728 = vadd.f32 %v615, %v727
    %v729 = vpop.f32.mrb[0].mxu0
    %v730 = vadd.f32 %v617, %v729
    %731 = vmatprep.mubr.bf16.mxu0 0
    %732 = vmatmul.mubr.bf16.gmra.mrb[0].mxu0 %v286
    %v733 = vpop.f32.mrb[0].mxu0
    %v734 = vadd.f32 %v621, %v733
    %v735 = vpop.f32.mrb[0].mxu0
    %v736 = vadd.f32 %v623, %v735
    %v737 = vpop.f32.mrb[0].mxu0
    %v738 = vadd.f32 %v625, %v737
    %v739 = vpop.f32.mrb[0].mxu0
    %v740 = vadd.f32 %v627, %v739
    %741 = vmatprep.mubr.bf16.mxu0 0
    %742 = vmatmul.mubr.bf16.gmra.mrb[0].mxu0 %v289
    %v743 = vpop.f32.mrb[0].mxu0
    %v744 = vadd.f32 %v631, %v743
    %v745 = vpop.f32.mrb[0].mxu0
    %v746 = vadd.f32 %v633, %v745
    %v747 = vpop.f32.mrb[0].mxu0
    %v748 = vadd.f32 %v635, %v747
    %v749 = vpop.f32.mrb[0].mxu0
    %v750 = vadd.f32 %v637, %v749
    %751 = vmatprep.mubr.bf16.mxu0 0
    %752 = vmatmul.mubr.bf16.gmra.mrb[0].mxu0 %v292
    %v753 = vpop.f32.mrb[0].mxu0
    %v754 = vadd.f32 %v641, %v753
    %v755 = vpop.f32.mrb[0].mxu0
    %v756 = vadd.f32 %v643, %v755
    %v757 = vpop.f32.mrb[0].mxu0
    %v758 = vadd.f32 %v645, %v757
    %v759 = vpop.f32.mrb[0].mxu0
    %v760 = vadd.f32 %v647, %v759
    %761 = vmatprep.mubr.bf16.mxu0 0
    %762 = vmatmul.mubr.bf16.gmra.mrb[0].mxu0 %v295
    %v763 = vpop.f32.mrb[0].mxu0
    %v764 = vadd.f32 %v651, %v763
    %v765 = vpop.f32.mrb[0].mxu0
    %v766 = vadd.f32 %v653, %v765
    %v767 = vpop.f32.mrb[0].mxu0
    %v768 = vadd.f32 %v655, %v767
    %v769 = vpop.f32.mrb[0].mxu0
    %v770 = vadd.f32 %v657, %v769
    %771 = vmatprep.mubr.bf16.mxu0 0
    %772 = vmatmul.mubr.bf16.gmra.mrb[0].mxu0 %v298
    %v773 = vpop.f32.mrb[0].mxu0
    %v774 = vadd.f32 %v661, %v773
    %v775 = vpop.f32.mrb[0].mxu0
    %v776 = vadd.f32 %v663, %v775
    %v777 = vpop.f32.mrb[0].mxu0
    %v778 = vadd.f32 %v665, %v777
    %v779 = vpop.f32.mrb[0].mxu0
    %v780 = vadd.f32 %v667, %v779
    %781 = vmatprep.mubr.bf16.mxu0 0
    %782 = vmatmul.mubr.bf16.gmra.mrb[0].mxu0 %v301
    %v783 = vpop.f32.mrb[0].mxu0
    %v784 = vadd.f32 %v671, %v783
    %v785 = vpop.f32.mrb[0].mxu0
    %v786 = vadd.f32 %v673, %v785
    %v787 = vpop.f32.mrb[0].mxu0
    %v788 = vadd.f32 %v675, %v787
    %v789 = vpop.f32.mrb[0].mxu0
    %v790 = vadd.f32 %v677, %v789
    %791 = vdwg.mxu0
    %v792 = vadd.f32 %v86, %v714
    %v793 = vadd.f32 %v87, %v716
    %v794 = vadd.f32 %v88, %v718
    %v795 = vadd.f32 %v89, %v720
    %v796 = vadd.f32 %v90, %v724
    %v797 = vadd.f32 %v91, %v726
    %v798 = vadd.f32 %v92, %v728
    %v799 = vadd.f32 %v93, %v730
    %v800 = vadd.f32 %v94, %v734
    %v801 = vadd.f32 %v95, %v736
    %v802 = vadd.f32 %v96, %v738
    %v803 = vadd.f32 %v97, %v740
    %v804 = vadd.f32 %v98, %v744
    %v805 = vadd.f32 %v99, %v746
    %v806 = vadd.f32 %v100, %v748
    %v807 = vadd.f32 %v101, %v750
    %v808 = vadd.f32 %v102, %v754
    %v809 = vadd.f32 %v103, %v756
    %v810 = vadd.f32 %v104, %v758
    %v811 = vadd.f32 %v105, %v760
    %v812 = vadd.f32 %v106, %v764
    %v813 = vadd.f32 %v107, %v766
    %v814 = vadd.f32 %v108, %v768
    %v815 = vadd.f32 %v109, %v770
    %v816 = vadd.f32 %v110, %v774
    %v817 = vadd.f32 %v111, %v776
    %v818 = vadd.f32 %v112, %v778
    %v819 = vadd.f32 %v113, %v780
    %v820 = vadd.f32 %v114, %v784
    %v821 = vadd.f32 %v115, %v786
    %v822 = vadd.f32 %v116, %v788
    %v823 = vadd.f32 %v117, %v790
    %824 = vst [vmem:[#allocation2] sm:$0xff] %v792
    %825 = vst [vmem:[#allocation2 + $0x8] sm:$0xff] %v793
    %826 = vst [vmem:[#allocation2 + $0x10] sm:$0xff] %v794
    %827 = vst [vmem:[#allocation2 + $0x18] sm:$0xff] %v795
    %828 = vst [vmem:[#allocation2 + $0x20] sm:$0xff] %v796
    %829 = vst [vmem:[#allocation2 + $0x28] sm:$0xff] %v797
    %830 = vst [vmem:[#allocation2 + $0x30] sm:$0xff] %v798
    %831 = vst [vmem:[#allocation2 + $0x38] sm:$0xff] %v799
    %832 = vst [vmem:[#allocation2 + $0x40] sm:$0xff] %v800
    %833 = vst [vmem:[#allocation2 + $0x48] sm:$0xff] %v801
    %834 = vst [vmem:[#allocation2 + $0x50] sm:$0xff] %v802
    %835 = vst [vmem:[#allocation2 + $0x58] sm:$0xff] %v803
    %836 = vst [vmem:[#allocation2 + $0x60] sm:$0xff] %v804
    %837 = vst [vmem:[#allocation2 + $0x68] sm:$0xff] %v805
    %838 = vst [vmem:[#allocation2 + $0x70] sm:$0xff] %v806
    %839 = vst [vmem:[#allocation2 + $0x78] sm:$0xff] %v807
    %840 = vst [vmem:[#allocation2 + $0x80] sm:$0xff] %v808
    %841 = vst [vmem:[#allocation2 + $0x88] sm:$0xff] %v809
    %842 = vst [vmem:[#allocation2 + $0x90] sm:$0xff] %v810
    %843 = vst [vmem:[#allocation2 + $0x98] sm:$0xff] %v811
    %844 = vst [vmem:[#allocation2 + $0xa0] sm:$0xff] %v812
    %845 = vst [vmem:[#allocation2 + $0xa8] sm:$0xff] %v813
    %846 = vst [vmem:[#allocation2 + $0xb0] sm:$0xff] %v814
    %847 = vst [vmem:[#allocation2 + $0xb8] sm:$0xff] %v815
    %848 = vst [vmem:[#allocation2 + $0xc0] sm:$0xff] %v816
    %849 = vst [vmem:[#allocation2 + $0xc8] sm:$0xff] %v817
    %850 = vst [vmem:[#allocation2 + $0xd0] sm:$0xff] %v818
    %851 = vst [vmem:[#allocation2 + $0xd8] sm:$0xff] %v819
    %852 = vst [vmem:[#allocation2 + $0xe0] sm:$0xff] %v820
    %853 = vst [vmem:[#allocation2 + $0xe8] sm:$0xff] %v821
    %854 = vst [vmem:[#allocation2 + $0xf0] sm:$0xff] %v822
    %855 = vst [vmem:[#allocation2 + $0xf8] sm:$0xff] %v823
    // Predicated region
    $region34: #{tpu_custom_call.1} parent=1 // pred_check
      %p856 = pneg %p50
    $region35: #{tpu_custom_call.1} parent=1 // pred_check_branch
      %858 = sbr.rel (%p856) target = $region37
    $region36: #{tpu_custom_call.1} parent=1 // pred_region
      %v859 = vld [vmem:[#allocation2] sm:$0xff]
      %v860 = vld [vmem:[#allocation2 + $0x8] sm:$0xff]
      %v861 = vld [vmem:[#allocation2 + $0x10] sm:$0xff]
      %v862 = vld [vmem:[#allocation2 + $0x18] sm:$0xff]
      %v863 = vld [vmem:[#allocation2 + $0x20] sm:$0xff]
      %v864 = vld [vmem:[#allocation2 + $0x28] sm:$0xff]
      %v865 = vld [vmem:[#allocation2 + $0x30] sm:$0xff]
      %v866 = vld [vmem:[#allocation2 + $0x38] sm:$0xff]
      %v867 = vld [vmem:[#allocation2 + $0x40] sm:$0xff]
      %v868 = vld [vmem:[#allocation2 + $0x48] sm:$0xff]
      %v869 = vld [vmem:[#allocation2 + $0x50] sm:$0xff]
      %v870 = vld [vmem:[#allocation2 + $0x58] sm:$0xff]
      %v871 = vld [vmem:[#allocation2 + $0x60] sm:$0xff]
      %v872 = vld [vmem:[#allocation2 + $0x68] sm:$0xff]
      %v873 = vld [vmem:[#allocation2 + $0x70] sm:$0xff]
      %v874 = vld [vmem:[#allocation2 + $0x78] sm:$0xff]
      %v875 = vld [vmem:[#allocation2 + $0x80] sm:$0xff]
      %v876 = vld [vmem:[#allocation2 + $0x88] sm:$0xff]
      %v877 = vld [vmem:[#allocation2 + $0x90] sm:$0xff]
      %v878 = vld [vmem:[#allocation2 + $0x98] sm:$0xff]
      %v879 = vld [vmem:[#allocation2 + $0xa0] sm:$0xff]
      %v880 = vld [vmem:[#allocation2 + $0xa8] sm:$0xff]
      %v881 = vld [vmem:[#allocation2 + $0xb0] sm:$0xff]
      %v882 = vld [vmem:[#allocation2 + $0xb8] sm:$0xff]
      %v883 = vld [vmem:[#allocation2 + $0xc0] sm:$0xff]
      %v884 = vld [vmem:[#allocation2 + $0xc8] sm:$0xff]
      %v885 = vld [vmem:[#allocation2 + $0xd0] sm:$0xff]
      %v886 = vld [vmem:[#allocation2 + $0xd8] sm:$0xff]
      %v887 = vld [vmem:[#allocation2 + $0xe0] sm:$0xff]
      %v888 = vld [vmem:[#allocation2 + $0xe8] sm:$0xff]
      %v889 = vld [vmem:[#allocation2 + $0xf0] sm:$0xff]
      %v890 = vld [vmem:[#allocation2 + $0xf8] sm:$0xff]
      %v891 = vld [vmem:[%s2] sm:$0x3]
      %v893 = vlaneseq
      %v894 = vshrl.u32 %v893, 7
      %v895 = vsub.s32 0, %v894
      %v896 = vrot.slane %v891, %v895
      %v897 = vlaneseq
      %v898 = vshrl.u32 %v897, 7
      %v899 = vsub.s32 1, %v898
      %v900 = vrot.slane %v891, %v899
      %v903 = vadd.f32 %v859, %v896
      %v904 = vadd.f32 %v860, %v900
      %v905 = vadd.f32 %v861, %v896
      %v906 = vadd.f32 %v862, %v900
      %v907 = vadd.f32 %v863, %v896
      %v908 = vadd.f32 %v864, %v900
      %v909 = vadd.f32 %v865, %v896
      %v910 = vadd.f32 %v866, %v900
      %v911 = vadd.f32 %v867, %v896
      %v912 = vadd.f32 %v868, %v900
      %v913 = vadd.f32 %v869, %v896
      %v914 = vadd.f32 %v870, %v900
      %v915 = vadd.f32 %v871, %v896
      %v916 = vadd.f32 %v872, %v900
      %v917 = vadd.f32 %v873, %v896
      %v918 = vadd.f32 %v874, %v900
      %v919 = vadd.f32 %v875, %v896
      %v920 = vadd.f32 %v876, %v900
      %v921 = vadd.f32 %v877, %v896
      %v922 = vadd.f32 %v878, %v900
      %v923 = vadd.f32 %v879, %v896
      %v924 = vadd.f32 %v880, %v900
      %v925 = vadd.f32 %v881, %v896
      %v926 = vadd.f32 %v882, %v900
      %v927 = vadd.f32 %v883, %v896
      %v928 = vadd.f32 %v884, %v900
      %v929 = vadd.f32 %v885, %v896
      %v930 = vadd.f32 %v886, %v900
      %v931 = vadd.f32 %v887, %v896
      %v932 = vadd.f32 %v888, %v900
      %v933 = vadd.f32 %v889, %v896
      %v934 = vadd.f32 %v890, %v900
      %v935 = vadd.f32 %v903, %v905
      %v936 = vadd.f32 %v935, %v907
      %v937 = vadd.f32 %v936, %v909
      %v938 = vadd.f32 %v937, %v911
      %v939 = vadd.f32 %v938, %v913
      %v940 = vadd.f32 %v939, %v915
      %v941 = vadd.f32 %v940, %v917
      %v942 = vadd.f32 %v941, %v919
      %v943 = vadd.f32 %v942, %v921
      %v944 = vadd.f32 %v943, %v923
      %v945 = vadd.f32 %v944, %v925
      %v946 = vadd.f32 %v945, %v927
      %v947 = vadd.f32 %v946, %v929
      %v948 = vadd.f32 %v947, %v931
      %v949 = vadd.f32 %v948, %v933
      %v950 = vrot.slane %v949, 4
      %v951 = vadd.f32 %v949, %v950
      %v952 = vrot.slane %v951, 2
      %v953 = vadd.f32 %v951, %v952
      %v954 = vrot.slane %v953, 1
      %v955 = vadd.f32 %v953, %v954
      %v956 = vadd.f32 %v904, %v906
      %v957 = vadd.f32 %v956, %v908
      %v958 = vadd.f32 %v957, %v910
      %v959 = vadd.f32 %v958, %v912
      %v960 = vadd.f32 %v959, %v914
      %v961 = vadd.f32 %v960, %v916
      %v962 = vadd.f32 %v961, %v918
      %v963 = vadd.f32 %v962, %v920
      %v964 = vadd.f32 %v963, %v922
      %v965 = vadd.f32 %v964, %v924
      %v966 = vadd.f32 %v965, %v926
      %v967 = vadd.f32 %v966, %v928
      %v968 = vadd.f32 %v967, %v930
      %v969 = vadd.f32 %v968, %v932
      %v970 = vadd.f32 %v969, %v934
      %v971 = vrot.slane %v970, 4
      %v972 = vadd.f32 %v970, %v971
      %v973 = vrot.slane %v972, 2
      %v974 = vadd.f32 %v972, %v973
      %v975 = vrot.slane %v974, 1
      %v976 = vadd.f32 %v974, %v975
      %v977 = vmul.f32 %v955, 0.0078125
      %v978 = vmul.f32 %v976, 0.0078125
      %v979 = vsub.f32 %v903, %v977
      %v980 = vsub.f32 %v904, %v978
      %v981 = vsub.f32 %v905, %v977
      %v982 = vsub.f32 %v906, %v978
      %v983 = vsub.f32 %v907, %v977
      %v984 = vsub.f32 %v908, %v978
      %v985 = vsub.f32 %v909, %v977
      %v986 = vsub.f32 %v910, %v978
      %v987 = vsub.f32 %v911, %v977
      %v988 = vsub.f32 %v912, %v978
      %v989 = vsub.f32 %v913, %v977
      %v990 = vsub.f32 %v914, %v978
      %v991 = vsub.f32 %v915, %v977
      %v992 = vsub.f32 %v916, %v978
      %v993 = vsub.f32 %v917, %v977
      %v994 = vsub.f32 %v918, %v978
      %v995 = vsub.f32 %v919, %v977
      %v996 = vsub.f32 %v920, %v978
      %v997 = vsub.f32 %v921, %v977
      %v998 = vsub.f32 %v922, %v978
      %v999 = vsub.f32 %v923, %v977
      %v1000 = vsub.f32 %v924, %v978
      %v1001 = vsub.f32 %v925, %v977
      %v1002 = vsub.f32 %v926, %v978
      %v1003 = vsub.f32 %v927, %v977
      %v1004 = vsub.f32 %v928, %v978
      %v1005 = vsub.f32 %v929, %v977
      %v1006 = vsub.f32 %v930, %v978
      %v1007 = vsub.f32 %v931, %v977
      %v1008 = vsub.f32 %v932, %v978
      %v1009 = vsub.f32 %v933, %v977
      %v1010 = vsub.f32 %v934, %v978
      %v1011 = vmul.f32 %v979, %v979
      %v1012 = vmul.f32 %v980, %v980
      %v1013 = vmul.f32 %v981, %v981
      %v1014 = vmul.f32 %v982, %v982
      %v1015 = vmul.f32 %v983, %v983
      %v1016 = vmul.f32 %v984, %v984
      %v1017 = vmul.f32 %v985, %v985
      %v1018 = vmul.f32 %v986, %v986
      %v1019 = vmul.f32 %v987, %v987
      %v1020 = vmul.f32 %v988, %v988
      %v1021 = vmul.f32 %v989, %v989
      %v1022 = vmul.f32 %v990, %v990
      %v1023 = vmul.f32 %v991, %v991
      %v1024 = vmul.f32 %v992, %v992
      %v1025 = vmul.f32 %v993, %v993
      %v1026 = vmul.f32 %v994, %v994
      %v1027 = vmul.f32 %v995, %v995
      %v1028 = vmul.f32 %v996, %v996
      %v1029 = vmul.f32 %v997, %v997
      %v1030 = vmul.f32 %v998, %v998
      %v1031 = vmul.f32 %v999, %v999
      %v1032 = vmul.f32 %v1000, %v1000
      %v1033 = vmul.f32 %v1001, %v1001
      %v1034 = vmul.f32 %v1002, %v1002
      %v1035 = vmul.f32 %v1003, %v1003
      %v1036 = vmul.f32 %v1004, %v1004
      %v1037 = vmul.f32 %v1005, %v1005
      %v1038 = vmul.f32 %v1006, %v1006
      %v1039 = vmul.f32 %v1007, %v1007
      %v1040 = vmul.f32 %v1008, %v1008
      %v1041 = vmul.f32 %v1009, %v1009
      %v1042 = vmul.f32 %v1010, %v1010
      %v1043 = vadd.f32 %v1011, %v1013
      %v1044 = vadd.f32 %v1043, %v1015
      %v1045 = vadd.f32 %v1044, %v1017
      %v1046 = vadd.f32 %v1045, %v1019
      %v1047 = vadd.f32 %v1046, %v1021
      %v1048 = vadd.f32 %v1047, %v1023
      %v1049 = vadd.f32 %v1048, %v1025
      %v1050 = vadd.f32 %v1049, %v1027
      %v1051 = vadd.f32 %v1050, %v1029
      %v1052 = vadd.f32 %v1051, %v1031
      %v1053 = vadd.f32 %v1052, %v1033
      %v1054 = vadd.f32 %v1053, %v1035
      %v1055 = vadd.f32 %v1054, %v1037
      %v1056 = vadd.f32 %v1055, %v1039
      %v1057 = vadd.f32 %v1056, %v1041
      %v1058 = vrot.slane %v1057, 4
      %v1059 = vadd.f32 %v1057, %v1058
      %v1060 = vrot.slane %v1059, 2
      %v1061 = vadd.f32 %v1059, %v1060
      %v1062 = vrot.slane %v1061, 1
      %v1063 = vadd.f32 %v1061, %v1062
      %v1064 = vadd.f32 %v1012, %v1014
      %v1065 = vadd.f32 %v1064, %v1016
      %v1066 = vadd.f32 %v1065, %v1018
      %v1067 = vadd.f32 %v1066, %v1020
      %v1068 = vadd.f32 %v1067, %v1022
      %v1069 = vadd.f32 %v1068, %v1024
      %v1070 = vadd.f32 %v1069, %v1026
      %v1071 = vadd.f32 %v1070, %v1028
      %v1072 = vadd.f32 %v1071, %v1030
      %v1073 = vadd.f32 %v1072, %v1032
      %v1074 = vadd.f32 %v1073, %v1034
      %v1075 = vadd.f32 %v1074, %v1036
      %v1076 = vadd.f32 %v1075, %v1038
      %v1077 = vadd.f32 %v1076, %v1040
      %v1078 = vadd.f32 %v1077, %v1042
      %v1079 = vrot.slane %v1078, 4
      %v1080 = vadd.f32 %v1078, %v1079
      %v1081 = vrot.slane %v1080, 2
      %v1082 = vadd.f32 %v1080, %v1081
      %v1083 = vrot.slane %v1082, 1
      %v1084 = vadd.f32 %v1082, %v1083
      %v1085 = vmul.f32 %v1063, 0.0078125
      %v1086 = vmul.f32 %v1084, 0.0078125
      %v1087 = vld [vmem:[%s3] sm:$0x3]
      %v1088 = vadd.f32 %v1085, 1e-05
      %v1089 = vadd.f32 %v1086, 1e-05
      %v1090 = vrsqrt.pop %v1088
      %v1091 = vrsqrt.pop %v1089
      %v1094 = vcombine.low %v1090, %v1091
      %v1096 = vunpack.c.l.s4 1966171168
      %v1097 = vunpack.c.0.s8 %v1096
      %v1098 = vlaneseq
      %v1099 = vshrl.u32 %v1098, 7
      %v1100 = vsub.s32 %v1097, %v1099
      %v1101 = vrot.slane %v1094, %v1100
      %v1103 = vunpack.c.l.s4 1966171168
      %v1104 = vunpack.c.0.s8 %v1103
      %v1105 = vlaneseq
      %v1106 = vshrl.u32 %v1105, 7
      %v1107 = vsub.s32 %v1104, %v1106
      %v1108 = vrot.slane %v1101, %v1107
      %v1110 = vmul.f32 %v1087, %v1108
      %v1111 = vld [vmem:[%s4] sm:$0x3]
      %v1113 = vlaneseq
      %v1114 = vshrl.u32 %v1113, 7
      %v1115 = vsub.s32 0, %v1114
      %v1116 = vrot.slane %v1110, %v1115
      %v1117 = vlaneseq
      %v1118 = vshrl.u32 %v1117, 7
      %v1119 = vsub.s32 1, %v1118
      %v1120 = vrot.slane %v1110, %v1119
      %v1123 = vmul.f32 %v977, %v1116
      %v1124 = vmul.f32 %v978, %v1120
      %v1127 = vcombine.low %v1123, %v1124
      %v1129 = vunpack.c.l.s4 1966171168
      %v1130 = vunpack.c.0.s8 %v1129
      %v1131 = vlaneseq
      %v1132 = vshrl.u32 %v1131, 7
      %v1133 = vsub.s32 %v1130, %v1132
      %v1134 = vrot.slane %v1127, %v1133
      %v1136 = vunpack.c.l.s4 1966171168
      %v1137 = vunpack.c.0.s8 %v1136
      %v1138 = vlaneseq
      %v1139 = vshrl.u32 %v1138, 7
      %v1140 = vsub.s32 %v1137, %v1139
      %v1141 = vrot.slane %v1134, %v1140
      %v1143 = vsub.f32 %v1111, %v1141
      %v1144 = vmul.f32 %v903, %v1116
      %v1145 = vmul.f32 %v904, %v1120
      %v1146 = vmul.f32 %v905, %v1116
      %v1147 = vmul.f32 %v906, %v1120
      %v1148 = vmul.f32 %v907, %v1116
      %v1149 = vmul.f32 %v908, %v1120
      %v1150 = vmul.f32 %v909, %v1116
      %v1151 = vmul.f32 %v910, %v1120
      %v1152 = vmul.f32 %v911, %v1116
      %v1153 = vmul.f32 %v912, %v1120
      %v1154 = vmul.f32 %v913, %v1116
      %v1155 = vmul.f32 %v914, %v1120
      %v1156 = vmul.f32 %v915, %v1116
      %v1157 = vmul.f32 %v916, %v1120
      %v1158 = vmul.f32 %v917, %v1116
      %v1159 = vmul.f32 %v918, %v1120
      %v1160 = vmul.f32 %v919, %v1116
      %v1161 = vmul.f32 %v920, %v1120
      %v1162 = vmul.f32 %v921, %v1116
      %v1163 = vmul.f32 %v922, %v1120
      %v1164 = vmul.f32 %v923, %v1116
      %v1165 = vmul.f32 %v924, %v1120
      %v1166 = vmul.f32 %v925, %v1116
      %v1167 = vmul.f32 %v926, %v1120
      %v1168 = vmul.f32 %v927, %v1116
      %v1169 = vmul.f32 %v928, %v1120
      %v1170 = vmul.f32 %v929, %v1116
      %v1171 = vmul.f32 %v930, %v1120
      %v1172 = vmul.f32 %v931, %v1116
      %v1173 = vmul.f32 %v932, %v1120
      %v1174 = vmul.f32 %v933, %v1116
      %v1175 = vmul.f32 %v934, %v1120
      %v1177 = vlaneseq
      %v1178 = vshrl.u32 %v1177, 7
      %v1179 = vsub.s32 0, %v1178
      %v1180 = vrot.slane %v1143, %v1179
      %v1181 = vlaneseq
      %v1182 = vshrl.u32 %v1181, 7
      %v1183 = vsub.s32 1, %v1182
      %v1184 = vrot.slane %v1143, %v1183
      %v1187 = vadd.f32 %v1144, %v1180
      %v1188 = vadd.f32 %v1145, %v1184
      %v1189 = vadd.f32 %v1146, %v1180
      %v1190 = vadd.f32 %v1147, %v1184
      %v1191 = vadd.f32 %v1148, %v1180
      %v1192 = vadd.f32 %v1149, %v1184
      %v1193 = vadd.f32 %v1150, %v1180
      %v1194 = vadd.f32 %v1151, %v1184
      %v1195 = vadd.f32 %v1152, %v1180
      %v1196 = vadd.f32 %v1153, %v1184
      %v1197 = vadd.f32 %v1154, %v1180
      %v1198 = vadd.f32 %v1155, %v1184
      %v1199 = vadd.f32 %v1156, %v1180
      %v1200 = vadd.f32 %v1157, %v1184
      %v1201 = vadd.f32 %v1158, %v1180
      %v1202 = vadd.f32 %v1159, %v1184
      %v1203 = vadd.f32 %v1160, %v1180
      %v1204 = vadd.f32 %v1161, %v1184
      %v1205 = vadd.f32 %v1162, %v1180
      %v1206 = vadd.f32 %v1163, %v1184
      %v1207 = vadd.f32 %v1164, %v1180
      %v1208 = vadd.f32 %v1165, %v1184
      %v1209 = vadd.f32 %v1166, %v1180
      %v1210 = vadd.f32 %v1167, %v1184
      %v1211 = vadd.f32 %v1168, %v1180
      %v1212 = vadd.f32 %v1169, %v1184
      %v1213 = vadd.f32 %v1170, %v1180
      %v1214 = vadd.f32 %v1171, %v1184
      %v1215 = vadd.f32 %v1172, %v1180
      %v1216 = vadd.f32 %v1173, %v1184
      %v1217 = vadd.f32 %v1174, %v1180
      %v1218 = vadd.f32 %v1175, %v1184
      %vm1219 = vcmp.ge.f32.partialorder %v1187, 0.0
      %vm1220 = vcmp.ge.f32.partialorder %v1188, 0.0
      %vm1221 = vcmp.ge.f32.partialorder %v1189, 0.0
      %vm1222 = vcmp.ge.f32.partialorder %v1190, 0.0
      %vm1223 = vcmp.ge.f32.partialorder %v1191, 0.0
      %vm1224 = vcmp.ge.f32.partialorder %v1192, 0.0
      %vm1225 = vcmp.ge.f32.partialorder %v1193, 0.0
      %vm1226 = vcmp.ge.f32.partialorder %v1194, 0.0
      %vm1227 = vcmp.ge.f32.partialorder %v1195, 0.0
      %vm1228 = vcmp.ge.f32.partialorder %v1196, 0.0
      %vm1229 = vcmp.ge.f32.partialorder %v1197, 0.0
      %vm1230 = vcmp.ge.f32.partialorder %v1198, 0.0
      %vm1231 = vcmp.ge.f32.partialorder %v1199, 0.0
      %vm1232 = vcmp.ge.f32.partialorder %v1200, 0.0
      %vm1233 = vcmp.ge.f32.partialorder %v1201, 0.0
      %vm1234 = vcmp.ge.f32.partialorder %v1202, 0.0
      %vm1235 = vcmp.ge.f32.partialorder %v1203, 0.0
      %vm1236 = vcmp.ge.f32.partialorder %v1204, 0.0
      %vm1237 = vcmp.ge.f32.partialorder %v1205, 0.0
      %vm1238 = vcmp.ge.f32.partialorder %v1206, 0.0
      %vm1239 = vcmp.ge.f32.partialorder %v1207, 0.0
      %vm1240 = vcmp.ge.f32.partialorder %v1208, 0.0
      %vm1241 = vcmp.ge.f32.partialorder %v1209, 0.0
      %vm1242 = vcmp.ge.f32.partialorder %v1210, 0.0
      %vm1243 = vcmp.ge.f32.partialorder %v1211, 0.0
      %vm1244 = vcmp.ge.f32.partialorder %v1212, 0.0
      %vm1245 = vcmp.ge.f32.partialorder %v1213, 0.0
      %vm1246 = vcmp.ge.f32.partialorder %v1214, 0.0
      %vm1247 = vcmp.ge.f32.partialorder %v1215, 0.0
      %vm1248 = vcmp.ge.f32.partialorder %v1216, 0.0
      %vm1249 = vcmp.ge.f32.partialorder %v1217, 0.0
      %vm1250 = vcmp.ge.f32.partialorder %v1218, 0.0
      %v1251 = vmul.f32 %v1187, 0.001
      %v1252 = vmul.f32 %v1188, 0.001
      %v1253 = vmul.f32 %v1189, 0.001
      %v1254 = vmul.f32 %v1190, 0.001
      %v1255 = vmul.f32 %v1191, 0.001
      %v1256 = vmul.f32 %v1192, 0.001
      %v1257 = vmul.f32 %v1193, 0.001
      %v1258 = vmul.f32 %v1194, 0.001
      %v1259 = vmul.f32 %v1195, 0.001
      %v1260 = vmul.f32 %v1196, 0.001
      %v1261 = vmul.f32 %v1197, 0.001
      %v1262 = vmul.f32 %v1198, 0.001
      %v1263 = vmul.f32 %v1199, 0.001
      %v1264 = vmul.f32 %v1200, 0.001
      %v1265 = vmul.f32 %v1201, 0.001
      %v1266 = vmul.f32 %v1202, 0.001
      %v1267 = vmul.f32 %v1203, 0.001
      %v1268 = vmul.f32 %v1204, 0.001
      %v1269 = vmul.f32 %v1205, 0.001
      %v1270 = vmul.f32 %v1206, 0.001
      %v1271 = vmul.f32 %v1207, 0.001
      %v1272 = vmul.f32 %v1208, 0.001
      %v1273 = vmul.f32 %v1209, 0.001
      %v1274 = vmul.f32 %v1210, 0.001
      %v1275 = vmul.f32 %v1211, 0.001
      %v1276 = vmul.f32 %v1212, 0.001
      %v1277 = vmul.f32 %v1213, 0.001
      %v1278 = vmul.f32 %v1214, 0.001
      %v1279 = vmul.f32 %v1215, 0.001
      %v1280 = vmul.f32 %v1216, 0.001
      %v1281 = vmul.f32 %v1217, 0.001
      %v1282 = vmul.f32 %v1218, 0.001
      %v1283 = vsel %vm1219, %v1187, %v1251
      %v1284 = vsel %vm1220, %v1188, %v1252
      %v1285 = vsel %vm1221, %v1189, %v1253
      %v1286 = vsel %vm1222, %v1190, %v1254
      %v1287 = vsel %vm1223, %v1191, %v1255
      %v1288 = vsel %vm1224, %v1192, %v1256
      %v1289 = vsel %vm1225, %v1193, %v1257
      %v1290 = vsel %vm1226, %v1194, %v1258
      %v1291 = vsel %vm1227, %v1195, %v1259
      %v1292 = vsel %vm1228, %v1196, %v1260
      %v1293 = vsel %vm1229, %v1197, %v1261
      %v1294 = vsel %vm1230, %v1198, %v1262
      %v1295 = vsel %vm1231, %v1199, %v1263
      %v1296 = vsel %vm1232, %v1200, %v1264
      %v1297 = vsel %vm1233, %v1201, %v1265
      %v1298 = vsel %vm1234, %v1202, %v1266
      %v1299 = vsel %vm1235, %v1203, %v1267
      %v1300 = vsel %vm1236, %v1204, %v1268
      %v1301 = vsel %vm1237, %v1205, %v1269
      %v1302 = vsel %vm1238, %v1206, %v1270
      %v1303 = vsel %vm1239, %v1207, %v1271
      %v1304 = vsel %vm1240, %v1208, %v1272
      %v1305 = vsel %vm1241, %v1209, %v1273
      %v1306 = vsel %vm1242, %v1210, %v1274
      %v1307 = vsel %vm1243, %v1211, %v1275
      %v1308 = vsel %vm1244, %v1212, %v1276
      %v1309 = vsel %vm1245, %v1213, %v1277
      %v1310 = vsel %vm1246, %v1214, %v1278
      %v1311 = vsel %vm1247, %v1215, %v1279
      %v1312 = vsel %vm1248, %v1216, %v1280
      %v1313 = vsel %vm1249, %v1217, %v1281
      %v1314 = vsel %vm1250, %v1218, %v1282
      %1315 = vst [vmem:[#allocation8] sm:$0xff] %v1283
      %1316 = vst [vmem:[#allocation8 + $0x8] sm:$0xff] %v1284
      %1317 = vst [vmem:[#allocation8 + $0x10] sm:$0xff] %v1285
      %1318 = vst [vmem:[#allocation8 + $0x18] sm:$0xff] %v1286
      %1319 = vst [vmem:[#allocation8 + $0x20] sm:$0xff] %v1287
      %1320 = vst [vmem:[#allocation8 + $0x28] sm:$0xff] %v1288
      %1321 = vst [vmem:[#allocation8 + $0x30] sm:$0xff] %v1289
      %1322 = vst [vmem:[#allocation8 + $0x38] sm:$0xff] %v1290
      %1323 = vst [vmem:[#allocation8 + $0x40] sm:$0xff] %v1291
      %1324 = vst [vmem:[#allocation8 + $0x48] sm:$0xff] %v1292
      %1325 = vst [vmem:[#allocation8 + $0x50] sm:$0xff] %v1293
      %1326 = vst [vmem:[#allocation8 + $0x58] sm:$0xff] %v1294
      %1327 = vst [vmem:[#allocation8 + $0x60] sm:$0xff] %v1295
      %1328 = vst [vmem:[#allocation8 + $0x68] sm:$0xff] %v1296
      %1329 = vst [vmem:[#allocation8 + $0x70] sm:$0xff] %v1297
      %1330 = vst [vmem:[#allocation8 + $0x78] sm:$0xff] %v1298
      %1331 = vst [vmem:[#allocation8 + $0x80] sm:$0xff] %v1299
      %1332 = vst [vmem:[#allocation8 + $0x88] sm:$0xff] %v1300
      %1333 = vst [vmem:[#allocation8 + $0x90] sm:$0xff] %v1301
      %1334 = vst [vmem:[#allocation8 + $0x98] sm:$0xff] %v1302
      %1335 = vst [vmem:[#allocation8 + $0xa0] sm:$0xff] %v1303
      %1336 = vst [vmem:[#allocation8 + $0xa8] sm:$0xff] %v1304
      %1337 = vst [vmem:[#allocation8 + $0xb0] sm:$0xff] %v1305
      %1338 = vst [vmem:[#allocation8 + $0xb8] sm:$0xff] %v1306
      %1339 = vst [vmem:[#allocation8 + $0xc0] sm:$0xff] %v1307
      %1340 = vst [vmem:[#allocation8 + $0xc8] sm:$0xff] %v1308
      %1341 = vst [vmem:[#allocation8 + $0xd0] sm:$0xff] %v1309
      %1342 = vst [vmem:[#allocation8 + $0xd8] sm:$0xff] %v1310
      %1343 = vst [vmem:[#allocation8 + $0xe0] sm:$0xff] %v1311
      %1344 = vst [vmem:[#allocation8 + $0xe8] sm:$0xff] %v1312
      %1345 = vst [vmem:[#allocation8 + $0xf0] sm:$0xff] %v1313
      %1346 = vst [vmem:[#allocation8 + $0xf8] sm:$0xff] %v1314
    $region37: #{tpu_custom_call.1} parent=1 // pred_fallthru
      _
    // Predicated region
    $region38: #{tpu_custom_call.1} parent=1 // pred_check
      _
    $region39: #{tpu_custom_call.1} parent=1 // pred_check_branch
      %1348 = sbr.rel (0) target = $region41
    $region40: #{tpu_custom_call.1} parent=1 // pred_region
      %s1350 = ssub.s32 4096, 4096
      %1351 = vsyncadd [#allocation5], %s1350
      %s1352 = sshll.u32 [#allocation8], 4
      %s1353 = int_to_ptr.vmem [resolvable:$true] %s1352
      %1358 = dma.vmem_to_hbm [thread:$0]  %s1353, 4096, %s5, [#allocation5], 256, 256, 16
    $region41: #{tpu_custom_call.1} parent=1 // pred_fallthru
      _
    // Predicated region
    $region42: #{tpu_custom_call.1} parent=1 // pred_check
      _
    $region43: #{tpu_custom_call.1} parent=1 // pred_check_branch
      %1360 = sbr.rel (0) target = $region45
    $region44: #{tpu_custom_call.1} parent=1 // pred_region
      %1361 = dma.done [#allocation5], 4096
    $region45: #{tpu_custom_call.1} parent=1 // pred_fallthru
      _
    %1362 = vsyncpa [#allocation4], 1
    %1363 = vsyncpa [#allocation7], 1
    %1364 = vsyncpa [#allocation5], 1

</llo_original>
